<compile_context>
chip_gen: v7x
topology: tpu7x:2x2x1
jax: 0.10.0
libtpu: 0.0.40
codegen_flags: <defaults>
</compile_context>

<pallas_src>
import functools

import jax
import jax.numpy as jnp
from jax.experimental import pallas as pl
from jax.experimental.pallas import tpu as pltpu


def _round_up(n, m):
    return ((n + m - 1) // m) * m


def _layout(in_features, layers):
    """Row offsets of each weight block inside the packed weight slab.

    Block 0 (first layer) has round_up(in_features, 16) rows (bf16 sublane
    tile); every later layer block and the fused head block has 128 rows,
    because the hidden activation is kept lane-dense at width 128.
    """
    r0 = _round_up(max(in_features, 1), 16)
    offsets = [0]
    for i in range(1, len(layers)):
        offsets.append(r0 + (i - 1) * 128)
    head_off = r0 + (len(layers) - 1) * 128
    total_rows = head_off + 128
    return tuple(offsets), head_off, total_rows


def pack_params(params, in_features, layers, n_actions):
    """Pack weights (bf16) and biases (f32) into two lane-dense (width 128) slabs.

    Weights are stored [in, out] (transposed vs. nn.Linear.weight).  The value
    head (H,1) and advantage head (H,A) are fused into one 128-wide block:
    column 0 = value, columns 1:1+A = advantages, the rest is zero padding.
    """
    n_layers = len(layers)
    assert all(d <= 128 for d in layers), "layer widths must be <= 128"
    assert 1 + n_actions <= 128, "n_actions must be <= 127"
    offsets, head_off, total_rows = _layout(in_features, layers)

    wbuf = jnp.zeros((total_rows, 128), jnp.bfloat16)
    bbuf = jnp.zeros((_round_up(n_layers + 1, 8), 128), jnp.float32)

    dims = [in_features, *layers]
    for i in range(n_layers):
        din, dout = dims[i], dims[i + 1]
        wbuf = wbuf.at[offsets[i]:offsets[i] + din, 0:dout].set(
            params[f"w{i}"].astype(jnp.bfloat16))
        bbuf = bbuf.at[i, 0:dout].set(params[f"b{i}"].reshape(dout))

    last = layers[-1]
    wbuf = wbuf.at[head_off:head_off + last, 0:1].set(
        params["wv"].astype(jnp.bfloat16))
    wbuf = wbuf.at[head_off:head_off + last, 1:1 + n_actions].set(
        params["wa"].astype(jnp.bfloat16))
    bbuf = bbuf.at[n_layers, 0].set(params["bv"].reshape(()))
    bbuf = bbuf.at[n_layers, 1:1 + n_actions].set(params["ba"].reshape(n_actions))
    return wbuf, bbuf


def _hash_uniform(shape, seed_u32, row_offset_u32=0):
    """Deterministic U[0,1) noise from a 32-bit hash of (global flat index, seed).

    Pure jnp integer ops -> identical inside the Pallas kernel (per batch tile,
    with the tile's global row offset) and in the pure-JAX reference.
    """
    seed_u32 = jnp.asarray(seed_u32, jnp.uint32)
    row_off = jnp.asarray(row_offset_u32, jnp.uint32)
    rows = jax.lax.broadcasted_iota(jnp.uint32, shape, 0) + row_off
    cols = jax.lax.broadcasted_iota(jnp.uint32, shape, 1)
    idx = rows * jnp.uint32(shape[1]) + cols
    h = (idx + jnp.uint32(1)) * jnp.uint32(0x9E3779B9) \
        + seed_u32 * jnp.uint32(0x85EBCA6B)
    h = h ^ (h >> 16)
    h = h * jnp.uint32(0x7FEB352D)
    h = h ^ (h >> 15)
    h = h * jnp.uint32(0x846CA68B)
    h = h ^ (h >> 16)
    # Top 24 bits -> exact f32 in [0, 1).
    return (h >> 8).astype(jnp.int32).astype(jnp.float32) * (1.0 / (1 << 24))


def _dueling_kernel(seed_ref, x_ref, w_ref, b_ref, q_ref, psum_ref, *,
                    in_features, w_offsets, head_off, n_layers, n_actions,
                    batch, tile_rows, noise_scale, lrelu_slope):
    tile = pl.program_id(0)
    x = x_ref[...].astype(jnp.float32)                 # (TB, F); input DMA is bf16

    if noise_scale != 0.0:
        # _add_uniform_noise: x + noise_scale * (U[0,1) - 0.5), generated on-chip
        # from the GLOBAL row index so it is invariant to the batch tiling.
        row_off = (tile * tile_rows).astype(jnp.uint32)
        u = _hash_uniform(x.shape, seed_ref[0].astype(jnp.uint32), row_off)
        x = x + noise_scale * (u - 0.5)

    # Feedforward stack.  h stays lane-dense (TB, 128); padded lanes are zero
    # (zero weight cols + zero bias -> 0 -> LeakyReLU(0) = 0), so the 128-wide
    # contraction of later layers is exact.
    h = x
    for li in range(n_layers):
        off = w_offsets[li]
        din = in_features if li == 0 else 128
        w = w_ref[off:off + din, :]                    # bf16 (din, 128)
        b = b_ref[li:li + 1, :]                        # f32  (1, 128)
        h = jnp.dot(h.astype(jnp.bfloat16), w,
                    preferred_element_type=jnp.float32) + b
        # LeakyReLU with the module's (negative, asserted <= 0) slope.
        h = jnp.where(h >= 0, h, lrelu_slope * h)

    # Fused value+advantage head: one lane-dense (128-wide) matmul.
    w_head = w_ref[head_off:head_off + 128, :]         # bf16 (128, 128)
    b_head = b_ref[n_layers:n_layers + 1, :]           # f32  (1, 128)
    head = jnp.dot(h.astype(jnp.bfloat16), w_head,
                   preferred_element_type=jnp.float32) + b_head
    value = head[:, 0:1]                               # (TB, 1)
    advs = head[:, 1:1 + n_actions]                    # (TB, A)

    # q before the global-mean correction; the scalar mean is subtracted in the
    # wrapper (fused by XLA), so tiles stay independent ("parallel"-safe).
    q_ref[...] = value + advs                          # (TB, A)

    # Masked partial sum of advantages for this tile (exclude padded rows).
    g_row = tile * tile_rows + jax.lax.broadcasted_iota(jnp.int32, advs.shape, 0)
    adv_part = jnp.sum(jnp.where(g_row < batch, advs, 0.0))
    psum_ref[...] = adv_part * jnp.ones(psum_ref.shape, jnp.float32)


def simple_dueling_net_forward(x, seed, wbuf, bbuf, *, in_features, layers,
                               n_actions, noise_scale=0.02, lrelu_slope=-0.01,
                               block_rows=512):
    """x: (B, in_features) f32 (cast to bf16 at the kernel boundary).
    Returns (B, n_actions) f32 Q-values."""
    B, F = x.shape
    assert F == in_features
    w_offsets, head_off, total_rows = _layout(in_features, layers)
    assert wbuf.shape == (total_rows, 128)
    assert bbuf.shape == (_round_up(len(layers) + 1, 8), 128)

    block_rows = _round_up(block_rows, 8)
    tile_rows = min(block_rows, _round_up(B, 8))
    b_pad = _round_up(B, tile_rows)
    num_tiles = b_pad // tile_rows

    x_bf = x.astype(jnp.bfloat16)                      # halve input DMA
    if b_pad != B:
        x_bf = jnp.pad(x_bf, ((0, b_pad - B), (0, 0)))
    seed_arr = jnp.asarray([seed], jnp.int32)

    kernel = functools.partial(
        _dueling_kernel,
        in_features=in_features, w_offsets=w_offsets, head_off=head_off,
        n_layers=len(layers), n_actions=n_actions, batch=B,
        tile_rows=tile_rows, noise_scale=float(noise_scale),
        lrelu_slope=float(lrelu_slope))

    grid_spec = pltpu.PrefetchScalarGridSpec(
        num_scalar_prefetch=1,                         # seed -> SMEM scalar
        grid=(num_tiles,),
        in_specs=[
            # x: one batch tile per grid step (pipelined, double-buffered).
            pl.BlockSpec((tile_rows, in_features), lambda i, s: (i, 0)),
            # Weight / bias slabs: constant index_map -> DMA'd once, resident.
            pl.BlockSpec(wbuf.shape, lambda i, s: (0, 0)),
            pl.BlockSpec(bbuf.shape, lambda i, s: (0, 0)),
        ],
        out_specs=(
            # q written lane-exact as (B_pad, n_actions) — no 128-wide slab.
            pl.BlockSpec((tile_rows, n_actions), lambda i, s: (i, 0)),
            # per-tile partial advantage sums (tiny).
            pl.BlockSpec((8, 128), lambda i, s: (i, 0)),
        ),
    )

    q_pre, psums = pl.pallas_call(
        kernel,
        out_shape=(
            jax.ShapeDtypeStruct((b_pad, n_actions), jnp.float32),
            jax.ShapeDtypeStruct((num_tiles * 8, 128), jnp.float32),
        ),
        grid_spec=grid_spec,
        compiler_params=pltpu.CompilerParams(
            dimension_semantics=("parallel",),          # v7x megacore split
            vmem_limit_bytes=32 * 1024 * 1024),
    )(seed_arr, x_bf, wbuf, bbuf)

    # Global mean over batch AND actions (faithful to torch .mean() with no dim),
    # reconstructed from per-tile partial sums; subtraction fuses with the slice.
    adv_sum = psums.reshape(num_tiles, -1)[:, 0].sum()
    adv_mean = adv_sum / (B * n_actions)
    return q_pre[:B] - adv_mean


def init_params(key, in_features, n_actions, layers=(32, 16, 16)):
    """Synthetic params. Weights stored [in, out] (transposed vs nn.Linear.weight)."""
    dims = [in_features, *layers]
    params = {}
    for i in range(len(layers)):
        fan_in, fan_out = dims[i], dims[i + 1]
        key, kw, kb = jax.random.split(key, 3)
        bound = 1.0 / float(fan_in) ** 0.5
        params[f"w{i}"] = jax.random.uniform(kw, (fan_in, fan_out),
                                             jnp.float32, -bound, bound)
        params[f"b{i}"] = jax.random.uniform(kb, (1, fan_out),
                                             jnp.float32, -bound, bound)
    last = dims[-1]
    bound = 1.0 / float(last) ** 0.5
    for name, out_dim in (("v", 1), ("a", n_actions)):
        key, kw, kb = jax.random.split(key, 3)
        params[f"w{name}"] = jax.random.uniform(kw, (last, out_dim),
                                                jnp.float32, -bound, bound)
        params[f"b{name}"] = jax.random.uniform(kb, (1, out_dim),
                                                jnp.float32, -bound, bound)
    return params


def reference_forward(x, params, layers, n_actions, *, seed=0,
                      noise_scale=0.0, lrelu_slope=-0.01):
    """Pure-JAX reference mirroring the PyTorch module (and kernel numerics:
    bf16 input cast, bf16 matmuls with f32 accumulation)."""
    h = x.astype(jnp.bfloat16).astype(jnp.float32)
    if noise_scale != 0.0:
        u = _hash_uniform(x.shape, jnp.asarray(seed, jnp.uint32))
        h = h + noise_scale * (u - 0.5)

    def mm(a, w):
        return jnp.dot(a.astype(jnp.bfloat16), w.astype(jnp.bfloat16),
                       preferred_element_type=jnp.float32)

    for i in range(len(layers)):
        h = mm(h, params[f"w{i}"]) + params[f"b{i}"]
        h = jnp.where(h >= 0, h, lrelu_slope * h)
    value = mm(h, params["wv"]) + params["bv"]
    advs = mm(h, params["wa"]) + params["ba"]
    return value + (advs - jnp.mean(advs))


if __name__ == "__main__":
    key = jax.random.PRNGKey(0)

    in_features = 16
    n_actions = 4
    layers = (32, 16, 16)

    key, kp = jax.random.split(key)
    params = init_params(kp, in_features, n_actions, layers)
    wbuf, bbuf = pack_params(params, in_features, layers, n_actions)

    # 1) Small batch, deterministic path (noise disabled), single tile.
    key, kx = jax.random.split(key)
    x_small = jax.random.normal(kx, (8, in_features), jnp.float32)
    q0 = simple_dueling_net_forward(x_small, 0, wbuf, bbuf,
                                    in_features=in_features, layers=layers,
                                    n_actions=n_actions, noise_scale=0.0)
    q0 = jax.block_until_ready(q0)
    ref0 = reference_forward(x_small, params, layers, n_actions, noise_scale=0.0)
    assert q0.shape == (8, n_actions)
    assert jnp.allclose(q0, ref0, rtol=1e-2, atol=1e-2), "mismatch (no noise)"

    # 2) Multi-tile batch (B=300, tile=128 -> 3 tiles with padding) with noise
    #    (module default noise=0.01 -> noise_scale = 2*0.01 = 0.02), exercising
    #    the grid, the resident param slabs and the partial-sum mean path.
    key, kx2 = jax.random.split(key)
    B2, seed = 300, 123
    x_big = jax.random.normal(kx2, (B2, in_features), jnp.float32)
    q1 = jax.block_until_ready(
        simple_dueling_net_forward(x_big, seed, wbuf, bbuf,
                                   in_features=in_features, layers=layers,
                                   n_actions=n_actions, noise_scale=0.02,
                                   block_rows=128))
    ref1 = reference_forward(x_big, params, layers, n_actions,
                             seed=seed, noise_scale=0.02)
    assert q1.shape == (B2, n_actions)
    assert jnp.allclose(q1, ref1, rtol=1e-2, atol=1e-2), "mismatch (with noise)"

    # Same seed -> identical output; different seed -> different noise.
    q1b = jax.block_until_ready(
        simple_dueling_net_forward(x_big, seed, wbuf, bbuf,
                                   in_features=in_features, layers=layers,
                                   n_actions=n_actions, noise_scale=0.02,
                                   block_rows=128))
    q2 = jax.block_until_ready(
        simple_dueling_net_forward(x_big, 456, wbuf, bbuf,
                                   in_features=in_features, layers=layers,
                                   n_actions=n_actions, noise_scale=0.02,
                                   block_rows=128))
    assert jnp.array_equal(q1, q1b)
    assert not jnp.array_equal(q1, q2)

    print("KERNEL_OK")
</pallas_src>

<mosaic_0001>
module attributes {stable_mosaic.version = 11 : i64} {
  func.func @_dueling_kernel(%arg0: i32, %arg1: memref<1xi32, #tpu.memory_space<smem>>, %arg2: memref<8x16xbf16, #tpu.memory_space<vmem>>, %arg3: memref<400x128xbf16, #tpu.memory_space<vmem>>, %arg4: memref<8x128xf32, #tpu.memory_space<vmem>>, %arg5: memref<8x4xf32, #tpu.memory_space<vmem>>, %arg6: memref<8x128xf32, #tpu.memory_space<vmem>>) attributes {dimension_semantics = [#tpu.dimension_semantics<parallel>], iteration_bounds = array<i64: 1>, scalar_prefetch = 1 : i64, scratch_operands = 0 : i64, tpu.core_type = #tpu.core_type<tc>, window_params = [{transform_indices = @transform_0, window_bounds = array<i64: 8, 16>}, {pipeline_mode = #tpu.pipeline_mode<synchronous>, transform_indices = @transform_1, window_bounds = array<i64: 400, 128>}, {pipeline_mode = #tpu.pipeline_mode<synchronous>, transform_indices = @transform_2, window_bounds = array<i64: 8, 128>}, {transform_indices = @transform_3, window_bounds = array<i64: 8, 4>}, {transform_indices = @transform_4, window_bounds = array<i64: 8, 128>}]} {
    %c0 = arith.constant 0 : index
    %c0_0 = arith.constant 0 : index
    %0 = vector.load %arg2[%c0, %c0_0] : memref<8x16xbf16, #tpu.memory_space<vmem>>, vector<8x16xbf16>
    %1 = arith.extf %0 : vector<8x16xbf16> to vector<8x16xf32>
    %c0_1 = arith.constant 0 : index
    %c0_2 = arith.constant 0 : index
    %2 = vector.load %arg3[%c0_1, %c0_2] : memref<400x128xbf16, #tpu.memory_space<vmem>>, vector<16x128xbf16>
    %c0_3 = arith.constant 0 : index
    %c0_4 = arith.constant 0 : index
    %3 = vector.load %arg4[%c0_3, %c0_4] : memref<8x128xf32, #tpu.memory_space<vmem>>, vector<1x128xf32>
    %4 = arith.truncf %1 : vector<8x16xf32> to vector<8x16xbf16>
    %cst = arith.constant dense<0.000000e+00> : vector<8x128xf32>
    %5 = tpu.matmul %4, %2, %cst {dimension_numbers = #tpu.dot_dimension_numbers<[1], [0], [0], [1], [0, 0, 1, 1], [], []>} : vector<8x16xbf16>, vector<16x128xbf16>, vector<8x128xf32> -> vector<8x128xf32>
    %6 = vector.broadcast %3 : vector<1x128xf32> to vector<8x128xf32>
    %7 = arith.addf %5, %6 : vector<8x128xf32>
    %cst_5 = arith.constant 0.000000e+00 : f32
    %8 = vector.broadcast %cst_5 : f32 to vector<8x128xf32>
    %9 = arith.cmpf oge, %7, %8 : vector<8x128xf32>
    %cst_6 = arith.constant -0.00999999977 : f32
    %10 = vector.broadcast %cst_6 : f32 to vector<8x128xf32>
    %11 = arith.mulf %10, %7 : vector<8x128xf32>
    %12 = arith.select %9, %7, %11 : vector<8x128xi1>, vector<8x128xf32>
    %c16 = arith.constant 16 : index
    %c0_7 = arith.constant 0 : index
    %13 = vector.load %arg3[%c16, %c0_7] : memref<400x128xbf16, #tpu.memory_space<vmem>>, vector<128x128xbf16>
    %c1 = arith.constant 1 : index
    %c0_8 = arith.constant 0 : index
    %14 = vector.load %arg4[%c1, %c0_8] : memref<8x128xf32, #tpu.memory_space<vmem>>, vector<1x128xf32>
    %15 = arith.truncf %12 : vector<8x128xf32> to vector<8x128xbf16>
    %cst_9 = arith.constant dense<0.000000e+00> : vector<8x128xf32>
    %16 = tpu.matmul %15, %13, %cst_9 {dimension_numbers = #tpu.dot_dimension_numbers<[1], [0], [0], [1], [0, 0, 1, 1], [], []>} : vector<8x128xbf16>, vector<128x128xbf16>, vector<8x128xf32> -> vector<8x128xf32>
    %17 = vector.broadcast %14 : vector<1x128xf32> to vector<8x128xf32>
    %18 = arith.addf %16, %17 : vector<8x128xf32>
    %cst_10 = arith.constant 0.000000e+00 : f32
    %19 = vector.broadcast %cst_10 : f32 to vector<8x128xf32>
    %20 = arith.cmpf oge, %18, %19 : vector<8x128xf32>
    %cst_11 = arith.constant -0.00999999977 : f32
    %21 = vector.broadcast %cst_11 : f32 to vector<8x128xf32>
    %22 = arith.mulf %21, %18 : vector<8x128xf32>
    %23 = arith.select %20, %18, %22 : vector<8x128xi1>, vector<8x128xf32>
    %c144 = arith.constant 144 : index
    %c0_12 = arith.constant 0 : index
    %24 = vector.load %arg3[%c144, %c0_12] : memref<400x128xbf16, #tpu.memory_space<vmem>>, vector<128x128xbf16>
    %c2 = arith.constant 2 : index
    %c0_13 = arith.constant 0 : index
    %25 = vector.load %arg4[%c2, %c0_13] : memref<8x128xf32, #tpu.memory_space<vmem>>, vector<1x128xf32>
    %26 = arith.truncf %23 : vector<8x128xf32> to vector<8x128xbf16>
    %cst_14 = arith.constant dense<0.000000e+00> : vector<8x128xf32>
    %27 = tpu.matmul %26, %24, %cst_14 {dimension_numbers = #tpu.dot_dimension_numbers<[1], [0], [0], [1], [0, 0, 1, 1], [], []>} : vector<8x128xbf16>, vector<128x128xbf16>, vector<8x128xf32> -> vector<8x128xf32>
    %28 = vector.broadcast %25 : vector<1x128xf32> to vector<8x128xf32>
    %29 = arith.addf %27, %28 : vector<8x128xf32>
    %cst_15 = arith.constant 0.000000e+00 : f32
    %30 = vector.broadcast %cst_15 : f32 to vector<8x128xf32>
    %31 = arith.cmpf oge, %29, %30 : vector<8x128xf32>
    %cst_16 = arith.constant -0.00999999977 : f32
    %32 = vector.broadcast %cst_16 : f32 to vector<8x128xf32>
    %33 = arith.mulf %32, %29 : vector<8x128xf32>
    %34 = arith.select %31, %29, %33 : vector<8x128xi1>, vector<8x128xf32>
    %c272 = arith.constant 272 : index
    %c0_17 = arith.constant 0 : index
    %35 = vector.load %arg3[%c272, %c0_17] : memref<400x128xbf16, #tpu.memory_space<vmem>>, vector<128x128xbf16>
    %c3 = arith.constant 3 : index
    %c0_18 = arith.constant 0 : index
    %36 = vector.load %arg4[%c3, %c0_18] : memref<8x128xf32, #tpu.memory_space<vmem>>, vector<1x128xf32>
    %37 = arith.truncf %34 : vector<8x128xf32> to vector<8x128xbf16>
    %cst_19 = arith.constant dense<0.000000e+00> : vector<8x128xf32>
    %38 = tpu.matmul %37, %35, %cst_19 {dimension_numbers = #tpu.dot_dimension_numbers<[1], [0], [0], [1], [0, 0, 1, 1], [], []>} : vector<8x128xbf16>, vector<128x128xbf16>, vector<8x128xf32> -> vector<8x128xf32>
    %39 = vector.broadcast %36 : vector<1x128xf32> to vector<8x128xf32>
    %40 = arith.addf %38, %39 : vector<8x128xf32>
    %41 = vector.extract_strided_slice %40 {offsets = [0, 0], sizes = [8, 1], strides = [1, 1]} : vector<8x128xf32> to vector<8x1xf32>
    %42 = vector.extract_strided_slice %40 {offsets = [0, 1], sizes = [8, 4], strides = [1, 1]} : vector<8x128xf32> to vector<8x4xf32>
    %43 = vector.broadcast %41 : vector<8x1xf32> to vector<8x4xf32>
    %44 = arith.addf %43, %42 : vector<8x4xf32>
    %c0_20 = arith.constant 0 : index
    %c0_21 = arith.constant 0 : index
    %45 = vector.load %arg5[%c0_20, %c0_21] : memref<8x4xf32, #tpu.memory_space<vmem>>, vector<8x4xf32>
    tpu.vector_store %arg5[%c0_20, %c0_21], %44 {strides = array<i32>} : memref<8x4xf32, #tpu.memory_space<vmem>>, vector<8x4xf32>,
    %c8_i32 = arith.constant 8 : i32
    %46 = arith.muli %arg0, %c8_i32 : i32
    %47 = tpu.iota {dimensions = array<i32: 0>} : vector<8x4xi32>
    %48 = vector.broadcast %46 : i32 to vector<8x4xi32>
    %49 = arith.addi %48, %47 : vector<8x4xi32>
    %c8_i32_22 = arith.constant 8 : i32
    %50 = vector.broadcast %c8_i32_22 : i32 to vector<8x4xi32>
    %51 = arith.cmpi slt, %49, %50 : vector<8x4xi32>
    %cst_23 = arith.constant 0.000000e+00 : f32
    %52 = vector.broadcast %cst_23 : f32 to vector<8x4xf32>
    %53 = arith.select %51, %42, %52 : vector<8x4xi1>, vector<8x4xf32>
    %54 = vector.shape_cast %53 : vector<8x4xf32> to vector<1x8x4xf32>
    %cst_24 = arith.constant dense<0.000000e+00> : vector<1xf32>
    %55 = vector.multi_reduction <add>, %54, %cst_24 [1, 2] : vector<1x8x4xf32> to vector<1xf32>
    %56 = vector.shape_cast %55 : vector<1xf32> to vector<1x1x1xf32>
    %57 = vector.extract %56[0, 0, 0] : f32 from vector<1x1x1xf32>
    %cst_25 = arith.constant 1.000000e+00 : f32
    %58 = vector.broadcast %cst_25 : f32 to vector<8x128xf32>
    %59 = vector.broadcast %57 : f32 to vector<8x128xf32>
    %60 = arith.mulf %59, %58 : vector<8x128xf32>
    %c0_26 = arith.constant 0 : index
    %c0_27 = arith.constant 0 : index
    %61 = vector.load %arg6[%c0_26, %c0_27] : memref<8x128xf32, #tpu.memory_space<vmem>>, vector<8x128xf32>
    tpu.vector_store %arg6[%c0_26, %c0_27], %60 {strides = array<i32>} : memref<8x128xf32, #tpu.memory_space<vmem>>, vector<8x128xf32>,
    return
  }
  func.func @transform_0(%arg0: i32, %arg1: memref<1xi32, #tpu.memory_space<smem>>) -> (i32, i32) {
    %c0_i32 = arith.constant 0 : i32
    %c0_i32_0 = arith.constant 0 : i32
    return %arg0, %c0_i32 : i32, i32
  }
  func.func @transform_1(%arg0: i32, %arg1: memref<1xi32, #tpu.memory_space<smem>>) -> (i32, i32) {
    %c0_i32 = arith.constant 0 : i32
    %c0_i32_0 = arith.constant 0 : i32
    %c0_i32_1 = arith.constant 0 : i32
    return %c0_i32, %c0_i32_0 : i32, i32
  }
  func.func @transform_2(%arg0: i32, %arg1: memref<1xi32, #tpu.memory_space<smem>>) -> (i32, i32) {
    %c0_i32 = arith.constant 0 : i32
    %c0_i32_0 = arith.constant 0 : i32
    %c0_i32_1 = arith.constant 0 : i32
    return %c0_i32, %c0_i32_0 : i32, i32
  }
  func.func @transform_3(%arg0: i32, %arg1: memref<1xi32, #tpu.memory_space<smem>>) -> (i32, i32) {
    %c0_i32 = arith.constant 0 : i32
    %c0_i32_0 = arith.constant 0 : i32
    return %arg0, %c0_i32 : i32, i32
  }
  func.func @transform_4(%arg0: i32, %arg1: memref<1xi32, #tpu.memory_space<smem>>) -> (i32, i32) {
    %c0_i32 = arith.constant 0 : i32
    %c0_i32_0 = arith.constant 0 : i32
    return %arg0, %c0_i32 : i32, i32
  }
}

</mosaic_0001>

<llo_original>
// kernel: tpu_custom_call.1
$region0: #{tpu_custom_call.1}
  #allocation0 [shape = 'u32[]', space=smem, size = 0x4, offset = 0x4, fixed_abs, tag = 'smem constant byte address 0x4 - core index']
  #allocation1 [shape = 'u32[144,128]{1,0:T(1,128)}', space=vmem, size = 0x12000, scoped, tag = 'internal scratch']
  #allocation2 [shape = 's32[1]{0}', space=sflag, size = 0x4, scoped, tag = 'scoped memory for tpu_custom_call.1']
  #allocation3 [shape = 's32[1]{0:T(128)S(6)}', space=smem, size = 0x200, scoped, tag = 'prefetched SMEM operand 0']
  %s0 = inlined_call_operand.<no memory space> [shape: s32[1], index: 0, kind: input, shape index: {}]
  %s1 = inlined_call_operand.hbm [shape: bf16[8,16], index: 1, kind: input, shape index: {}]
  %s2 = inlined_call_operand.hbm [shape: bf16[400,128], index: 2, kind: input, shape index: {}]
  %s3 = inlined_call_operand.vmem [shape: f32[8,128], index: 3, kind: input, shape index: {}]
  %s4 = inlined_call_operand.vmem [shape: f32[8,4], index: 4, kind: output, shape index: {0}]
  %s5 = inlined_call_operand.hbm [shape: f32[8,128], index: 5, kind: output, shape index: {1}]
  %6 = xla_tuple %s4, %s5
  %s7 = sld [smem:[#allocation0]]
  $region38: #{tpu_custom_call.1} parent=0
    _
  %s9 = ssub.s32 1, %s7
  %s10 = scalar_select 0, %s9, %s7
  %11 = sst [smem:[#allocation3]] %s0
  $region1: #{tpu_custom_call.1} parent=0
    #allocation4 [shape = 'u8[2048]{0}', space=vmem, size = 0x800, scoped, tag = 'input window, operand 1, single buffered']
    #allocation5 [shape = 's32[1]{0}', space=sflag, size = 0x4, scoped, tag = 'scoped memory for tpu_custom_call.1']
    #allocation6 [shape = 's32[1]{0}', space=sflag, size = 0x4, scoped, tag = 'scoped memory for tpu_custom_call.1']
    #allocation7 [shape = 'u8[102400]{0}', space=vmem, size = 0x19000, scoped, tag = 'input window, operand 2, single buffered']
    #allocation8 [shape = 's32[1]{0}', space=sflag, size = 0x4, scoped, tag = 'scoped memory for tpu_custom_call.1']
    #allocation9 [shape = 'u8[4096]{0}', space=vmem, size = 0x1000, scoped, tag = 'output window, operand 1, single buffered']
    %12 = vsyncpa [#allocation5], 0
    %13 = vsyncpa [#allocation8], 0
    %14 = vsyncpa [#allocation6], 0
    // Predicated region
    $region2: #{tpu_custom_call.1} parent=1 // pred_check
      _
    $region3: #{tpu_custom_call.1} parent=1 // pred_check_branch
      %16 = sbr.rel (0) target = $region5
    $region4: #{tpu_custom_call.1} parent=1 // pred_region
      %s18 = ssub.s32 64, 64
      %19 = vsyncadd [#allocation5], %s18
      %s21 = sshll.u32 [#allocation4], 4
      %s22 = int_to_ptr.vmem [resolvable:$true] %s21
      %24 = dma.hbm_to_vmem [thread:$0]  %s1, 64, %s22, [#allocation5]
    $region5: #{tpu_custom_call.1} parent=1 // pred_fallthru
      _
    // Predicated region
    $region6: #{tpu_custom_call.1} parent=1 // pred_check
      _
    $region7: #{tpu_custom_call.1} parent=1 // pred_check_branch
      %26 = sbr.rel (0) target = $region9
    $region8: #{tpu_custom_call.1} parent=1 // pred_region
      %s28 = ssub.s32 3200, 3200
      %29 = vsyncadd [#allocation8], %s28
      %s30 = sshll.u32 [#allocation7], 4
      %s31 = int_to_ptr.vmem [resolvable:$true] %s30
      %36 = dma.hbm_to_vmem [thread:$0]  %s2, 3200, %s31, [#allocation8], 64, 64, 4
    $region9: #{tpu_custom_call.1} parent=1 // pred_fallthru
      _
    // Predicated region
    $region10: #{tpu_custom_call.1} parent=1 // pred_check
      _
    $region11: #{tpu_custom_call.1} parent=1 // pred_check_branch
      %38 = sbr.rel (0) target = $region13
    $region12: #{tpu_custom_call.1} parent=1 // pred_region
      _
    $region13: #{tpu_custom_call.1} parent=1 // pred_fallthru
      _
    // Predicated region
    $region14: #{tpu_custom_call.1} parent=1 // pred_check
      _
    $region15: #{tpu_custom_call.1} parent=1 // pred_check_branch
      %40 = sbr.rel (0) target = $region17
    $region16: #{tpu_custom_call.1} parent=1 // pred_region
      %41 = dma.done [#allocation5], 64
    $region17: #{tpu_custom_call.1} parent=1 // pred_fallthru
      _
    // Predicated region
    $region18: #{tpu_custom_call.1} parent=1 // pred_check
      _
    $region19: #{tpu_custom_call.1} parent=1 // pred_check_branch
      %43 = sbr.rel (0) target = $region21
    $region20: #{tpu_custom_call.1} parent=1 // pred_region
      %44 = dma.done [#allocation8], 3200
    $region21: #{tpu_custom_call.1} parent=1 // pred_fallthru
      _
    %v46 = vld [vmem:[#allocation4] sm:$0xf]
    %v47 = vld [vmem:[#allocation7] sm:$0xf]
    %v48 = vld [vmem:[#allocation7 + $0x4] sm:$0xf]
    %v49 = vld [vmem:[%s3] sm:$0x1]
    %v50 = vlaneseq
    %v51 = vshrl.u32 %v50, 7
    %v52 = vsub.s32 0, %v51
    %v53 = vrot.slane %v49, %v52
    %v56 = vunpack.c.l.b16 %v47
    %v57 = vunpack.c.l.b16 %v48
    %v58 = vpack.c.b16 %v57, %v56
    %vm60 = vcmask 130048
    %v62 = vsel %vm60, %v46, 0
    %64 = vmatprep.subr.bf16.mxu0 0
    %65 = vmatpush1.bf16.msra.mxu0 %v58
    %66 = vmatprep.subr.bf16.mxu0 0
    %67 = vmatpush1.bf16.msra.mxu0 0
    %68 = vmatprep.subr.bf16.mxu0 0
    %69 = vmatpush1.bf16.msra.mxu0 0
    %70 = vmatprep.subr.bf16.mxu0 0
    %71 = vmatpush1.bf16.msra.mxu0 0
    %72 = vmatprep.subr.bf16.mxu0 0
    %73 = vmatpush1.bf16.msra.mxu0 0
    %74 = vmatprep.subr.bf16.mxu0 0
    %75 = vmatpush1.bf16.msra.mxu0 0
    %76 = vmatprep.subr.bf16.mxu0 0
    %77 = vmatpush1.bf16.msra.mxu0 0
    %78 = vmatprep.subr.bf16.mxu0 0
    %79 = vmatpush1.bf16.msra.mxu0 0
    %80 = vmatprep.subr.bf16.mxu0 0
    %81 = vmatpush1.bf16.msra.mxu0 0
    %82 = vmatprep.subr.bf16.mxu0 0
    %83 = vmatpush1.bf16.msra.mxu0 0
    %84 = vmatprep.subr.bf16.mxu0 0
    %85 = vmatpush1.bf16.msra.mxu0 0
    %86 = vmatprep.subr.bf16.mxu0 0
    %87 = vmatpush1.bf16.msra.mxu0 0
    %88 = vmatprep.subr.bf16.mxu0 0
    %89 = vmatpush1.bf16.msra.mxu0 0
    %90 = vmatprep.subr.bf16.mxu0 0
    %91 = vmatpush1.bf16.msra.mxu0 0
    %92 = vmatprep.subr.bf16.mxu0 0
    %93 = vmatpush1.bf16.msra.mxu0 0
    %94 = vmatprep.subr.bf16.mxu0 0
    %95 = vmatpush1.bf16.msra.mxu0 0
    %96 = vmatprep.mubr.bf16.mxu0 0
    %97 = vmatmul.mubr.bf16.gmra.mrb[0].mxu0 %v62
    %v98 = vpop.f32.mrb[0].mxu0
    %v99 = vadd.f32 %v53, %v98
    %v100 = vpop.f32.mrb[0].mxu0
    %v101 = vpop.f32.mrb[0].mxu0
    %v102 = vpop.f32.mrb[0].mxu0
    %103 = vdwg.mxu0
    %vm104 = vcmp.ge.f32.partialorder %v99, 0.0
    %v105 = vmul.f32 %v99, -0.01
    %v106 = vsel %vm104, %v99, %v105
    %v107 = vld [vmem:[#allocation7 + $0x8] sm:$0xf]
    %v108 = vld [vmem:[#allocation7 + $0xc] sm:$0xf]
    %v109 = vld [vmem:[#allocation7 + $0x10] sm:$0xf]
    %v110 = vld [vmem:[#allocation7 + $0x14] sm:$0xf]
    %v111 = vld [vmem:[#allocation7 + $0x18] sm:$0xf]
    %v112 = vld [vmem:[#allocation7 + $0x1c] sm:$0xf]
    %v113 = vld [vmem:[#allocation7 + $0x20] sm:$0xf]
    %v114 = vld [vmem:[#allocation7 + $0x24] sm:$0xf]
    %v115 = vld [vmem:[#allocation7 + $0x28] sm:$0xf]
    %v116 = vld [vmem:[#allocation7 + $0x2c] sm:$0xf]
    %v117 = vld [vmem:[#allocation7 + $0x30] sm:$0xf]
    %v118 = vld [vmem:[#allocation7 + $0x34] sm:$0xf]
    %v119 = vld [vmem:[#allocation7 + $0x38] sm:$0xf]
    %v120 = vld [vmem:[#allocation7 + $0x3c] sm:$0xf]
    %v121 = vld [vmem:[#allocation7 + $0x40] sm:$0xf]
    %v122 = vld [vmem:[#allocation7 + $0x44] sm:$0xf]
    %v123 = vld [vmem:[%s3 + $0x1] sm:$0x1]
    %v124 = vpack.c.bf16 %v106, %v106
    %v125 = vlaneseq
    %v126 = vshrl.u32 %v125, 7
    %v127 = vsub.s32 0, %v126
    %v128 = vrot.slane %v123, %v127
    %v145 = vunpack.c.l.b16 %v107
    %v146 = vunpack.c.l.b16 %v108
    %v147 = vunpack.c.l.b16 %v109
    %v148 = vunpack.c.l.b16 %v110
    %v149 = vunpack.c.l.b16 %v111
    %v150 = vunpack.c.l.b16 %v112
    %v151 = vunpack.c.l.b16 %v113
    %v152 = vunpack.c.l.b16 %v114
    %v153 = vunpack.c.l.b16 %v115
    %v154 = vunpack.c.l.b16 %v116
    %v155 = vunpack.c.l.b16 %v117
    %v156 = vunpack.c.l.b16 %v118
    %v157 = vunpack.c.l.b16 %v119
    %v158 = vunpack.c.l.b16 %v120
    %v159 = vunpack.c.l.b16 %v121
    %v160 = vunpack.c.l.b16 %v122
    %v161 = vpack.c.b16 %v146, %v145
    %v162 = vpack.c.b16 %v148, %v147
    %v163 = vpack.c.b16 %v150, %v149
    %v164 = vpack.c.b16 %v152, %v151
    %v165 = vpack.c.b16 %v154, %v153
    %v166 = vpack.c.b16 %v156, %v155
    %v167 = vpack.c.b16 %v158, %v157
    %v168 = vpack.c.b16 %v160, %v159
    %177 = vmatprep.subr.bf16.mxu0 0
    %178 = vmatpush1.bf16.msra.mxu0 %v161
    %179 = vmatprep.subr.bf16.mxu0 0
    %180 = vmatpush1.bf16.msra.mxu0 %v162
    %181 = vmatprep.subr.bf16.mxu0 0
    %182 = vmatpush1.bf16.msra.mxu0 %v163
    %183 = vmatprep.subr.bf16.mxu0 0
    %184 = vmatpush1.bf16.msra.mxu0 %v164
    %185 = vmatprep.subr.bf16.mxu0 0
    %186 = vmatpush1.bf16.msra.mxu0 %v165
    %187 = vmatprep.subr.bf16.mxu0 0
    %188 = vmatpush1.bf16.msra.mxu0 %v166
    %189 = vmatprep.subr.bf16.mxu0 0
    %190 = vmatpush1.bf16.msra.mxu0 %v167
    %191 = vmatprep.subr.bf16.mxu0 0
    %192 = vmatpush1.bf16.msra.mxu0 %v168
    %193 = vmatprep.subr.bf16.mxu0 0
    %194 = vmatpush1.bf16.msra.mxu0 0
    %195 = vmatprep.subr.bf16.mxu0 0
    %196 = vmatpush1.bf16.msra.mxu0 0
    %197 = vmatprep.subr.bf16.mxu0 0
    %198 = vmatpush1.bf16.msra.mxu0 0
    %199 = vmatprep.subr.bf16.mxu0 0
    %200 = vmatpush1.bf16.msra.mxu0 0
    %201 = vmatprep.subr.bf16.mxu0 0
    %202 = vmatpush1.bf16.msra.mxu0 0
    %203 = vmatprep.subr.bf16.mxu0 0
    %204 = vmatpush1.bf16.msra.mxu0 0
    %205 = vmatprep.subr.bf16.mxu0 0
    %206 = vmatpush1.bf16.msra.mxu0 0
    %207 = vmatprep.subr.bf16.mxu0 0
    %208 = vmatpush1.bf16.msra.mxu0 0
    %209 = vmatprep.mubr.bf16.mxu0 0
    %210 = vmatmul.mubr.bf16.gmra.mrb[0].mxu0 %v124
    %v211 = vpop.f32.mrb[0].mxu0
    %v212 = vadd.f32 %v128, %v211
    %v213 = vpop.f32.mrb[0].mxu0
    %v214 = vpop.f32.mrb[0].mxu0
    %v215 = vpop.f32.mrb[0].mxu0
    %216 = vdwg.mxu0
    %vm217 = vcmp.ge.f32.partialorder %v212, 0.0
    %v218 = vmul.f32 %v212, -0.01
    %v219 = vsel %vm217, %v212, %v218
    %v220 = vld [vmem:[#allocation7 + $0x48] sm:$0xf]
    %v221 = vld [vmem:[#allocation7 + $0x4c] sm:$0xf]
    %v222 = vld [vmem:[#allocation7 + $0x50] sm:$0xf]
    %v223 = vld [vmem:[#allocation7 + $0x54] sm:$0xf]
    %v224 = vld [vmem:[#allocation7 + $0x58] sm:$0xf]
    %v225 = vld [vmem:[#allocation7 + $0x5c] sm:$0xf]
    %v226 = vld [vmem:[#allocation7 + $0x60] sm:$0xf]
    %v227 = vld [vmem:[#allocation7 + $0x64] sm:$0xf]
    %v228 = vld [vmem:[#allocation7 + $0x68] sm:$0xf]
    %v229 = vld [vmem:[#allocation7 + $0x6c] sm:$0xf]
    %v230 = vld [vmem:[#allocation7 + $0x70] sm:$0xf]
    %v231 = vld [vmem:[#allocation7 + $0x74] sm:$0xf]
    %v232 = vld [vmem:[#allocation7 + $0x78] sm:$0xf]
    %v233 = vld [vmem:[#allocation7 + $0x7c] sm:$0xf]
    %v234 = vld [vmem:[#allocation7 + $0x80] sm:$0xf]
    %v235 = vld [vmem:[#allocation7 + $0x84] sm:$0xf]
    %v236 = vld [vmem:[%s3 + $0x2] sm:$0x1]
    %v237 = vpack.c.bf16 %v219, %v219
    %v238 = vlaneseq
    %v239 = vshrl.u32 %v238, 7
    %v240 = vsub.s32 0, %v239
    %v241 = vrot.slane %v236, %v240
    %v258 = vunpack.c.l.b16 %v220
    %v259 = vunpack.c.l.b16 %v221
    %v260 = vunpack.c.l.b16 %v222
    %v261 = vunpack.c.l.b16 %v223
    %v262 = vunpack.c.l.b16 %v224
    %v263 = vunpack.c.l.b16 %v225
    %v264 = vunpack.c.l.b16 %v226
    %v265 = vunpack.c.l.b16 %v227
    %v266 = vunpack.c.l.b16 %v228
    %v267 = vunpack.c.l.b16 %v229
    %v268 = vunpack.c.l.b16 %v230
    %v269 = vunpack.c.l.b16 %v231
    %v270 = vunpack.c.l.b16 %v232
    %v271 = vunpack.c.l.b16 %v233
    %v272 = vunpack.c.l.b16 %v234
    %v273 = vunpack.c.l.b16 %v235
    %v274 = vpack.c.b16 %v259, %v258
    %v275 = vpack.c.b16 %v261, %v260
    %v276 = vpack.c.b16 %v263, %v262
    %v277 = vpack.c.b16 %v265, %v264
    %v278 = vpack.c.b16 %v267, %v266
    %v279 = vpack.c.b16 %v269, %v268
    %v280 = vpack.c.b16 %v271, %v270
    %v281 = vpack.c.b16 %v273, %v272
    %290 = vmatprep.subr.bf16.mxu0 0
    %291 = vmatpush1.bf16.msra.mxu0 %v274
    %292 = vmatprep.subr.bf16.mxu0 0
    %293 = vmatpush1.bf16.msra.mxu0 %v275
    %294 = vmatprep.subr.bf16.mxu0 0
    %295 = vmatpush1.bf16.msra.mxu0 %v276
    %296 = vmatprep.subr.bf16.mxu0 0
    %297 = vmatpush1.bf16.msra.mxu0 %v277
    %298 = vmatprep.subr.bf16.mxu0 0
    %299 = vmatpush1.bf16.msra.mxu0 %v278
    %300 = vmatprep.subr.bf16.mxu0 0
    %301 = vmatpush1.bf16.msra.mxu0 %v279
    %302 = vmatprep.subr.bf16.mxu0 0
    %303 = vmatpush1.bf16.msra.mxu0 %v280
    %304 = vmatprep.subr.bf16.mxu0 0
    %305 = vmatpush1.bf16.msra.mxu0 %v281
    %306 = vmatprep.subr.bf16.mxu0 0
    %307 = vmatpush1.bf16.msra.mxu0 0
    %308 = vmatprep.subr.bf16.mxu0 0
    %309 = vmatpush1.bf16.msra.mxu0 0
    %310 = vmatprep.subr.bf16.mxu0 0
    %311 = vmatpush1.bf16.msra.mxu0 0
    %312 = vmatprep.subr.bf16.mxu0 0
    %313 = vmatpush1.bf16.msra.mxu0 0
    %314 = vmatprep.subr.bf16.mxu0 0
    %315 = vmatpush1.bf16.msra.mxu0 0
    %316 = vmatprep.subr.bf16.mxu0 0
    %317 = vmatpush1.bf16.msra.mxu0 0
    %318 = vmatprep.subr.bf16.mxu0 0
    %319 = vmatpush1.bf16.msra.mxu0 0
    %320 = vmatprep.subr.bf16.mxu0 0
    %321 = vmatpush1.bf16.msra.mxu0 0
    %322 = vmatprep.mubr.bf16.mxu0 0
    %323 = vmatmul.mubr.bf16.gmra.mrb[0].mxu0 %v237
    %v324 = vpop.f32.mrb[0].mxu0
    %v325 = vadd.f32 %v241, %v324
    %v326 = vpop.f32.mrb[0].mxu0
    %v327 = vpop.f32.mrb[0].mxu0
    %v328 = vpop.f32.mrb[0].mxu0
    %329 = vdwg.mxu0
    %vm330 = vcmp.ge.f32.partialorder %v325, 0.0
    %v331 = vmul.f32 %v325, -0.01
    %v332 = vsel %vm330, %v325, %v331
    %v333 = vld [vmem:[#allocation7 + $0x88] sm:$0xf]
    %v334 = vld [vmem:[#allocation7 + $0x8c] sm:$0xf]
    %v335 = vld [vmem:[#allocation7 + $0x90] sm:$0xf]
    %v336 = vld [vmem:[#allocation7 + $0x94] sm:$0xf]
    %v337 = vld [vmem:[#allocation7 + $0x98] sm:$0xf]
    %v338 = vld [vmem:[#allocation7 + $0x9c] sm:$0xf]
    %v339 = vld [vmem:[#allocation7 + $0xa0] sm:$0xf]
    %v340 = vld [vmem:[#allocation7 + $0xa4] sm:$0xf]
    %v341 = vld [vmem:[#allocation7 + $0xa8] sm:$0xf]
    %v342 = vld [vmem:[#allocation7 + $0xac] sm:$0xf]
    %v343 = vld [vmem:[#allocation7 + $0xb0] sm:$0xf]
    %v344 = vld [vmem:[#allocation7 + $0xb4] sm:$0xf]
    %v345 = vld [vmem:[#allocation7 + $0xb8] sm:$0xf]
    %v346 = vld [vmem:[#allocation7 + $0xbc] sm:$0xf]
    %v347 = vld [vmem:[#allocation7 + $0xc0] sm:$0xf]
    %v348 = vld [vmem:[#allocation7 + $0xc4] sm:$0xf]
    %v349 = vld [vmem:[%s3 + $0x3] sm:$0x1]
    %v350 = vpack.c.bf16 %v332, %v332
    %v351 = vlaneseq
    %v352 = vshrl.u32 %v351, 7
    %v353 = vsub.s32 0, %v352
    %v354 = vrot.slane %v349, %v353
    %v371 = vunpack.c.l.b16 %v333
    %v372 = vunpack.c.l.b16 %v334
    %v373 = vunpack.c.l.b16 %v335
    %v374 = vunpack.c.l.b16 %v336
    %v375 = vunpack.c.l.b16 %v337
    %v376 = vunpack.c.l.b16 %v338
    %v377 = vunpack.c.l.b16 %v339
    %v378 = vunpack.c.l.b16 %v340
    %v379 = vunpack.c.l.b16 %v341
    %v380 = vunpack.c.l.b16 %v342
    %v381 = vunpack.c.l.b16 %v343
    %v382 = vunpack.c.l.b16 %v344
    %v383 = vunpack.c.l.b16 %v345
    %v384 = vunpack.c.l.b16 %v346
    %v385 = vunpack.c.l.b16 %v347
    %v386 = vunpack.c.l.b16 %v348
    %v387 = vpack.c.b16 %v372, %v371
    %v388 = vpack.c.b16 %v374, %v373
    %v389 = vpack.c.b16 %v376, %v375
    %v390 = vpack.c.b16 %v378, %v377
    %v391 = vpack.c.b16 %v380, %v379
    %v392 = vpack.c.b16 %v382, %v381
    %v393 = vpack.c.b16 %v384, %v383
    %v394 = vpack.c.b16 %v386, %v385
    %403 = vmatprep.subr.bf16.mxu0 0
    %404 = vmatpush1.bf16.msra.mxu0 %v387
    %405 = vmatprep.subr.bf16.mxu0 0
    %406 = vmatpush1.bf16.msra.mxu0 %v388
    %407 = vmatprep.subr.bf16.mxu0 0
    %408 = vmatpush1.bf16.msra.mxu0 %v389
    %409 = vmatprep.subr.bf16.mxu0 0
    %410 = vmatpush1.bf16.msra.mxu0 %v390
    %411 = vmatprep.subr.bf16.mxu0 0
    %412 = vmatpush1.bf16.msra.mxu0 %v391
    %413 = vmatprep.subr.bf16.mxu0 0
    %414 = vmatpush1.bf16.msra.mxu0 %v392
    %415 = vmatprep.subr.bf16.mxu0 0
    %416 = vmatpush1.bf16.msra.mxu0 %v393
    %417 = vmatprep.subr.bf16.mxu0 0
    %418 = vmatpush1.bf16.msra.mxu0 %v394
    %419 = vmatprep.subr.bf16.mxu0 0
    %420 = vmatpush1.bf16.msra.mxu0 0
    %421 = vmatprep.subr.bf16.mxu0 0
    %422 = vmatpush1.bf16.msra.mxu0 0
    %423 = vmatprep.subr.bf16.mxu0 0
    %424 = vmatpush1.bf16.msra.mxu0 0
    %425 = vmatprep.subr.bf16.mxu0 0
    %426 = vmatpush1.bf16.msra.mxu0 0
    %427 = vmatprep.subr.bf16.mxu0 0
    %428 = vmatpush1.bf16.msra.mxu0 0
    %429 = vmatprep.subr.bf16.mxu0 0
    %430 = vmatpush1.bf16.msra.mxu0 0
    %431 = vmatprep.subr.bf16.mxu0 0
    %432 = vmatpush1.bf16.msra.mxu0 0
    %433 = vmatprep.subr.bf16.mxu0 0
    %434 = vmatpush1.bf16.msra.mxu0 0
    %435 = vmatprep.mubr.bf16.mxu0 0
    %436 = vmatmul.mubr.bf16.gmra.mrb[0].mxu0 %v350
    %v437 = vpop.f32.mrb[0].mxu0
    %v438 = vadd.f32 %v354, %v437
    %v439 = vpop.f32.mrb[0].mxu0
    %v440 = vpop.f32.mrb[0].mxu0
    %v441 = vpop.f32.mrb[0].mxu0
    %442 = vdwg.mxu0
    %444 = vset.pattern.permute.xlu0 0
    %445 = vperm.xlu0 %444, %v438
    %v446 = vpop.permute.xlu0 %445
    %v448 = vadd.f32 %v446, %v438
    %450 = vrot.lane.b32.xlu0 %v448, 127
    %v451 = vpop.permute.xlu0 %450
    %vm453 = vcmask 31744
    %454 = vst.msk [vmem:[%s4] sm:$0xff] %vm453, %v451
    %s455 = smul.u32 0, 8
    %v456 = vlaneseq
    %v457 = vshrl.u32 %v456, 7
    %v458 = vstv %s455
    %v459 = vadd.s32 %v458, %v457
    %vm460 = vcmp.lt.s32.totalorder %v459, 8
    %v461 = vsel %vm460, %v438, 0.0
    %463 = vrot.lane.b32.xlu0 %v461, 127
    %v464 = vpop.permute.xlu0 %463
    %v466 = vsel %vm453, %v464, 0.0
    %467 = vadd.xlane.f32.xlu0 %v466
    %v468 = vpop.xlane.xlu0 %467
    %v469 = vrot.slane %v468, 4
    %v470 = vadd.f32 %v468, %v469
    %v471 = vrot.slane %v470, 2
    %v472 = vadd.f32 %v470, %v471
    %v473 = vrot.slane %v472, 1
    %v474 = vadd.f32 %v472, %v473
    %s475 = vtos %v474
    %v476 = vstv %s475
    %477 = vst [vmem:[#allocation9] sm:$0xff] %v476
    // Predicated region
    $region22: #{tpu_custom_call.1} parent=1 // pred_check
      _
    $region23: #{tpu_custom_call.1} parent=1 // pred_check_branch
      %479 = sbr.rel (0) target = $region25
    $region24: #{tpu_custom_call.1} parent=1 // pred_region
      _
    $region25: #{tpu_custom_call.1} parent=1 // pred_fallthru
      _
    // Predicated region
    $region26: #{tpu_custom_call.1} parent=1 // pred_check
      _
    $region27: #{tpu_custom_call.1} parent=1 // pred_check_branch
      %481 = sbr.rel (0) target = $region29
    $region28: #{tpu_custom_call.1} parent=1 // pred_region
      %s483 = ssub.s32 128, 128
      %484 = vsyncadd [#allocation6], %s483
      %s486 = sshll.u32 [#allocation9], 4
      %s487 = int_to_ptr.vmem [resolvable:$true] %s486
      %489 = dma.vmem_to_hbm [thread:$0]  %s487, 128, %s5, [#allocation6]
    $region29: #{tpu_custom_call.1} parent=1 // pred_fallthru
      _
    // Predicated region
    $region30: #{tpu_custom_call.1} parent=1 // pred_check
      _
    $region31: #{tpu_custom_call.1} parent=1 // pred_check_branch
      %491 = sbr.rel (0) target = $region33
    $region32: #{tpu_custom_call.1} parent=1 // pred_region
      _
    $region33: #{tpu_custom_call.1} parent=1 // pred_fallthru
      _
    // Predicated region
    $region34: #{tpu_custom_call.1} parent=1 // pred_check
      _
    $region35: #{tpu_custom_call.1} parent=1 // pred_check_branch
      %493 = sbr.rel (0) target = $region37
    $region36: #{tpu_custom_call.1} parent=1 // pred_region
      %494 = dma.done [#allocation6], 128
    $region37: #{tpu_custom_call.1} parent=1 // pred_fallthru
      _
    %495 = vsyncpa [#allocation5], 1
    %496 = vsyncpa [#allocation8], 1
    %497 = vsyncpa [#allocation6], 1

</llo_original>
